<compile_context>
chip_gen: v7x
topology: tpu7x:2x2x1
jax: 0.10.0
libtpu: 0.0.40
codegen_flags: <defaults>
</compile_context>

<pallas_src>
import functools

import jax
import jax.numpy as jnp
import numpy as np
from jax.experimental import pallas as pl
from jax.experimental.pallas import tpu as pltpu


# ----------------------------------------------------------------------------
# Kernel: per-pair EucCones energy E(x, y) for one (TILE_N, D) block of pairs.
# ----------------------------------------------------------------------------
def _euc_cones_energy_kernel(x_ref, y_ref, e_ref, *, k_sq, eps):
    x = x_ref[...].astype(jnp.float32)      # (TILE_N, D)
    y = y_ref[...].astype(jnp.float32)
    d = y - x

    # Row reductions over the lane (D) axis, then relayout immediately to a
    # lane-dense (1, TILE_N) row so the whole scalar epilogue runs on
    # ~TILE_N/128 dense vregs instead of ~TILE_N/8 sparse column vregs.
    x_sq = jnp.sum(x * x, axis=-1)[None, :]       # (1, TILE_N)
    d_sq = jnp.sum(d * d, axis=-1)[None, :]
    x_dot_d = jnp.sum(x * d, axis=-1)[None, :]

    eps_sq = eps * eps
    inv_x = jax.lax.rsqrt(jnp.maximum(x_sq, eps_sq))   # 1 / max(||x||,   eps)
    inv_d = jax.lax.rsqrt(jnp.maximum(d_sq, eps_sq))   # 1 / max(||y-x||, eps)

    # theta = -<x/||x||, (y-x)/||y-x||>   (F.normalize eps semantics)
    theta = -x_dot_d * inv_x * inv_d
    # psi = -sqrt(1 - K^2/||x||^2) = -sqrt(||x||^2 - K^2) / ||x||
    # (NaN if ||x|| <= K, matching the torch reference -- guard upstream.)
    psi = -jnp.sqrt(x_sq - k_sq) * inv_x

    # Lane-dense store: one (1, TILE_N) full-width row block per grid step.
    e_ref[...] = jnp.maximum(theta - psi, 0.0).astype(e_ref.dtype)


# ----------------------------------------------------------------------------
# Wrapper: tiling + pallas_call.
# ----------------------------------------------------------------------------
def _round_up(x, m):
    return ((x + m - 1) // m) * m


def _vmem_budget_bytes():
    """Generation-aware (double-buffer budget, scoped-VMEM limit)."""
    cap = None
    try:
        cap = getattr(pltpu.get_tpu_info(), "vmem_capacity_bytes", None)
    except Exception:
        cap = None
    if cap is not None and cap > 64 * 1024 * 1024:
        # v5e / v6e: 128 MiB physical VMEM -> afford bigger tiles.
        return 24 * 1024 * 1024, 64 * 1024 * 1024
    # v7x (64 MiB physical) or unknown: stay conservative.
    return 12 * 1024 * 1024, 32 * 1024 * 1024


def _choose_tile_n(n, d, budget_bytes, itemsize):
    # 2 inputs x 2 pipeline buffers x tile_n x d_lanes x itemsize <= budget.
    d_lanes = _round_up(d, 128)             # VMEM lane padding even if D%128
    per_row = 2 * 2 * d_lanes * itemsize
    t = budget_bytes // per_row
    t = max(128, min(int(t), 8192))         # let the VMEM budget bind
    t = (t // 128) * 128
    if n > 256:
        # Keep >= 2 grid steps so v7x can shard the 'parallel' axis on 2 TCs.
        t = min(t, _round_up(pl.cdiv(n, 2), 128))
    return max(128, t)


def euc_cones_energy(x, y, *, k=3.0, eps=1e-12, tile_n=None, interpret=False):
    """Per-pair E_operator for all rows of x, y (shape (N, D)). Returns (N,) f32."""
    n, d = x.shape
    assert y.shape == (n, d)
    if n == 0:
        return jnp.zeros((0,), jnp.float32)

    # Stream inputs in their own floating dtype (bf16 ok); kernel upcasts to f32.
    if not jnp.issubdtype(x.dtype, jnp.floating):
        x = x.astype(jnp.float32)
    if not jnp.issubdtype(y.dtype, jnp.floating):
        y = y.astype(jnp.float32)

    budget, vmem_limit = _vmem_budget_bytes()
    itemsize = max(jnp.dtype(x.dtype).itemsize, jnp.dtype(y.dtype).itemsize)
    if tile_n is None:
        tile_n = _choose_tile_n(n, d, budget, itemsize)
    if tile_n >= n:
        tile_n = n                          # single block == full array dims
    num_tiles = pl.cdiv(n, tile_n)

    kernel = functools.partial(
        _euc_cones_energy_kernel, k_sq=float(k) * float(k), eps=float(eps))

    bytes_in = n * d * (jnp.dtype(x.dtype).itemsize + jnp.dtype(y.dtype).itemsize)
    e = pl.pallas_call(
        kernel,
        out_shape=jax.ShapeDtypeStruct((1, n), jnp.float32),
        grid_spec=pltpu.PrefetchScalarGridSpec(
            num_scalar_prefetch=0,
            grid=(num_tiles,),
            in_specs=[
                pl.BlockSpec((tile_n, d), lambda i: (i, 0)),
                pl.BlockSpec((tile_n, d), lambda i: (i, 0)),
            ],
            out_specs=pl.BlockSpec((1, tile_n), lambda i: (0, i)),
        ),
        compiler_params=pltpu.CompilerParams(
            dimension_semantics=("parallel",),
            vmem_limit_bytes=vmem_limit,
        ),
        cost_estimate=pl.CostEstimate(
            flops=10 * n * d,
            transcendentals=3 * n,
            bytes_accessed=bytes_in + n * 4,
        ),
        interpret=interpret,
    )(x, y)

    return e[0]


def euc_cones_loss(x, y, status, *, alpha=1.0, k=3.0,
                   pos_weights=None, neg_weights=None,
                   tile_n=None, interpret=False):
    """One kernel pass over the whole edge stream + O(E) masked reduce.

    x, y:   (E, D) 'from' / 'to' embeddings.
    status: (E,)   1 = positive pair, 0 = negative pair.
    Returns (e_all, loss).
    """
    e_all = euc_cones_energy(x, y, k=k, tile_n=tile_n, interpret=interpret)
    status = jnp.asarray(status)
    pos_mask = status == 1
    neg_mask = status == 0
    wp = (jnp.ones_like(e_all) if pos_weights is None
          else jnp.asarray(pos_weights, jnp.float32))
    wn = (jnp.ones_like(e_all) if neg_weights is None
          else jnp.asarray(neg_weights, jnp.float32))
    pos_term = jnp.sum(jnp.where(pos_mask, wp * e_all, 0.0))
    neg_term = jnp.sum(jnp.where(neg_mask,
                                 wn * jnp.maximum(alpha - e_all, 0.0), 0.0))
    return e_all, pos_term + neg_term


# ----------------------------------------------------------------------------
# Glue mimicking EucConesLoss.forward (eval branch).
# ----------------------------------------------------------------------------
def make_model(num_nodes, dim, key_emb, key_scale, k=3.0):
    raw = jax.random.normal(key_emb, (num_nodes, dim), jnp.float32)
    norms = jnp.sqrt(jnp.sum(raw * raw, axis=-1, keepdims=True))
    # EucCones embeddings must satisfy ||x|| > K for psi(x) to be real;
    # place norms in [K+1, K+3].
    target = k + 1.0 + 2.0 * jax.random.uniform(key_scale, (num_nodes, 1),
                                                jnp.float32)
    emb_table = raw / jnp.maximum(norms, 1e-6) * target

    def model(indices):
        return emb_table[indices]           # (N,) int -> (N, D)

    return model


def forward_eval(model, inputs_from, inputs_to, status, alpha=1.0, k=3.0):
    pred_from = model(inputs_from)          # (E, D)
    pred_to = model(inputs_to)              # (E, D)

    # Single kernel pass over the whole stream; pos/neg split + margin on the
    # returned O(E) energies (no concatenate / padding copies of (E, D)).
    e_all, loss = euc_cones_loss(pred_from, pred_to, status, alpha=alpha, k=k)

    status_np = np.asarray(status)
    pos_idx = np.nonzero(status_np == 1)[0]
    neg_idx = np.nonzero(status_np == 0)[0]
    return pred_from, pred_to, loss, e_all[pos_idx], e_all[neg_idx]


# ----------------------------------------------------------------------------
# Pure-JAX reference mirroring the PyTorch E_operator / forward (eval branch).
# ----------------------------------------------------------------------------
def _reference_energy(x, y, k=3.0, eps=1e-12):
    x = x.astype(jnp.float32)
    y = y.astype(jnp.float32)
    x_norm = jnp.sqrt(jnp.sum(x * x, axis=-1))
    diff = y - x
    diff_norm = jnp.sqrt(jnp.sum(diff * diff, axis=-1))
    x_hat = x / jnp.maximum(x_norm, eps)[:, None]
    d_hat = diff / jnp.maximum(diff_norm, eps)[:, None]
    theta = -jnp.sum(x_hat * d_hat, axis=-1)
    psi = -jnp.sqrt(1.0 - (k * k) / (x_norm ** 2))
    return jnp.maximum(theta - psi, 0.0)


def _reference_loss(xp, yp, xn, yn, alpha, k):
    e_pos = _reference_energy(xp, yp, k)
    e_neg = _reference_energy(xn, yn, k)
    loss = jnp.sum(e_pos) + jnp.sum(jnp.maximum(alpha - e_neg, 0.0))
    return e_pos, e_neg, loss


if __name__ == "__main__":
    key = jax.random.PRNGKey(0)
    k_emb, k_scale, k_from, k_to, k_a, k_b = jax.random.split(key, 6)

    num_nodes = 20
    dim = 128            # embedding dim (lane axis)
    num_edges = 16       # 8 positive + 8 negative pairs
    alpha = 1.0
    K = 3.0

    model = make_model(num_nodes, dim, k_emb, k_scale, K)

    inputs_from = jax.random.randint(k_from, (num_edges,), 0, num_nodes)
    inputs_to = jax.random.randint(k_to, (num_edges,), 0, num_nodes)
    status = jnp.concatenate(
        [jnp.ones((num_edges // 2,), jnp.int32),
         jnp.zeros((num_edges // 2,), jnp.int32)])

    pred_from, pred_to, loss, e_pos, e_neg = forward_eval(
        model, inputs_from, inputs_to, status, alpha=alpha, k=K)
    jax.block_until_ready((pred_from, pred_to, loss, e_pos, e_neg))

    # ---- Correctness vs. pure-JAX reference (eval branch, unit weights) ----
    status_np = np.asarray(status)
    pos_idx = np.nonzero(status_np == 1)[0]
    neg_idx = np.nonzero(status_np == 0)[0]
    xp, yp = pred_from[pos_idx], pred_to[pos_idx]
    xn, yn = pred_from[neg_idx], pred_to[neg_idx]
    r_pos, r_neg, r_loss = _reference_loss(xp, yp, xn, yn, alpha, K)

    np.testing.assert_allclose(np.asarray(e_pos), np.asarray(r_pos),
                               rtol=1e-4, atol=1e-5)
    np.testing.assert_allclose(np.asarray(e_neg), np.asarray(r_neg),
                               rtol=1e-4, atol=1e-5)
    np.testing.assert_allclose(np.asarray(loss), np.asarray(r_loss),
                               rtol=1e-4, atol=1e-5)

    # ---- Multi-tile + ragged-last-block path (forced small tile) ----
    idx_a = jax.random.randint(k_a, (300,), 0, num_nodes)
    idx_b = jax.random.randint(k_b, (300,), 0, num_nodes)
    xa, yb = model(idx_a), model(idx_b)
    e_tiled = euc_cones_energy(xa, yb, k=K, tile_n=128)
    jax.block_until_ready(e_tiled)
    np.testing.assert_allclose(np.asarray(e_tiled),
                               np.asarray(_reference_energy(xa, yb, K)),
                               rtol=1e-4, atol=1e-5)

    # ---- bf16 streaming path (upcast to f32 inside the kernel) ----
    xa16, yb16 = xa.astype(jnp.bfloat16), yb.astype(jnp.bfloat16)
    e_bf16 = euc_cones_energy(xa16, yb16, k=K, tile_n=128)
    jax.block_until_ready(e_bf16)
    ref_bf16 = _reference_energy(xa16.astype(jnp.float32),
                                 yb16.astype(jnp.float32), K)
    np.testing.assert_allclose(np.asarray(e_bf16), np.asarray(ref_bf16),
                               rtol=1e-3, atol=1e-4)

    print("KERNEL_OK")
</pallas_src>

<mosaic_0001>
module attributes {stable_mosaic.version = 11 : i64} {
  func.func @_euc_cones_energy_kernel(%arg0: i32, %arg1: memref<16x128xf32, #tpu.memory_space<vmem>>, %arg2: memref<16x128xf32, #tpu.memory_space<vmem>>, %arg3: memref<1x16xf32, #tpu.memory_space<vmem>>) attributes {dimension_semantics = [#tpu.dimension_semantics<parallel>], iteration_bounds = array<i64: 1>, scalar_prefetch = 0 : i64, scratch_operands = 0 : i64, tpu.core_type = #tpu.core_type<tc>, window_params = [{transform_indices = @transform_0, window_bounds = array<i64: 16, 128>}, {transform_indices = @transform_1, window_bounds = array<i64: 16, 128>}, {transform_indices = @transform_2, window_bounds = array<i64: 1, 16>}]} {
    %c0 = arith.constant 0 : index
    %c0_0 = arith.constant 0 : index
    %0 = vector.load %arg1[%c0, %c0_0] : memref<16x128xf32, #tpu.memory_space<vmem>>, vector<16x128xf32>
    %c0_1 = arith.constant 0 : index
    %c0_2 = arith.constant 0 : index
    %1 = vector.load %arg2[%c0_1, %c0_2] : memref<16x128xf32, #tpu.memory_space<vmem>>, vector<16x128xf32>
    %2 = arith.subf %1, %0 : vector<16x128xf32>
    %3 = arith.mulf %0, %0 : vector<16x128xf32>
    %cst = arith.constant dense<0.000000e+00> : vector<16xf32>
    %4 = vector.multi_reduction <add>, %3, %cst [1] : vector<16x128xf32> to vector<16xf32>
    %5 = vector.shape_cast %4 : vector<16xf32> to vector<1x16xf32>
    %6 = arith.mulf %2, %2 : vector<16x128xf32>
    %cst_3 = arith.constant dense<0.000000e+00> : vector<16xf32>
    %7 = vector.multi_reduction <add>, %6, %cst_3 [1] : vector<16x128xf32> to vector<16xf32>
    %8 = vector.shape_cast %7 : vector<16xf32> to vector<1x16xf32>
    %9 = arith.mulf %0, %2 : vector<16x128xf32>
    %cst_4 = arith.constant dense<0.000000e+00> : vector<16xf32>
    %10 = vector.multi_reduction <add>, %9, %cst_4 [1] : vector<16x128xf32> to vector<16xf32>
    %11 = vector.shape_cast %10 : vector<16xf32> to vector<1x16xf32>
    %cst_5 = arith.constant 1.000000e-24 : f32
    %12 = vector.broadcast %cst_5 : f32 to vector<1x16xf32>
    %13 = arith.maximumf %5, %12 : vector<1x16xf32>
    %14 = math.rsqrt %13 : vector<1x16xf32>
    %cst_6 = arith.constant 1.000000e-24 : f32
    %15 = vector.broadcast %cst_6 : f32 to vector<1x16xf32>
    %16 = arith.maximumf %8, %15 : vector<1x16xf32>
    %17 = math.rsqrt %16 : vector<1x16xf32>
    %cst_7 = arith.constant 0.000000e+00 : f32
    %18 = vector.broadcast %cst_7 : f32 to vector<1x16xf32>
    %19 = arith.subf %18, %11 : vector<1x16xf32>
    %20 = arith.mulf %19, %14 : vector<1x16xf32>
    %21 = arith.mulf %20, %17 : vector<1x16xf32>
    %cst_8 = arith.constant 9.000000e+00 : f32
    %22 = vector.broadcast %cst_8 : f32 to vector<1x16xf32>
    %23 = arith.subf %5, %22 : vector<1x16xf32>
    %24 = math.sqrt %23 : vector<1x16xf32>
    %cst_9 = arith.constant 0.000000e+00 : f32
    %25 = vector.broadcast %cst_9 : f32 to vector<1x16xf32>
    %26 = arith.subf %25, %24 : vector<1x16xf32>
    %27 = arith.mulf %26, %14 : vector<1x16xf32>
    %28 = arith.subf %21, %27 : vector<1x16xf32>
    %cst_10 = arith.constant 0.000000e+00 : f32
    %29 = vector.broadcast %cst_10 : f32 to vector<1x16xf32>
    %30 = arith.maximumf %28, %29 : vector<1x16xf32>
    %c0_11 = arith.constant 0 : index
    %c0_12 = arith.constant 0 : index
    %31 = vector.load %arg3[%c0_11, %c0_12] : memref<1x16xf32, #tpu.memory_space<vmem>>, vector<1x16xf32>
    tpu.vector_store %arg3[%c0_11, %c0_12], %30 {strides = array<i32>} : memref<1x16xf32, #tpu.memory_space<vmem>>, vector<1x16xf32>,
    return
  }
  func.func @transform_0(%arg0: i32) -> (i32, i32) {
    %c0_i32 = arith.constant 0 : i32
    %c0_i32_0 = arith.constant 0 : i32
    return %arg0, %c0_i32 : i32, i32
  }
  func.func @transform_1(%arg0: i32) -> (i32, i32) {
    %c0_i32 = arith.constant 0 : i32
    %c0_i32_0 = arith.constant 0 : i32
    return %arg0, %c0_i32 : i32, i32
  }
  func.func @transform_2(%arg0: i32) -> (i32, i32) {
    %c0_i32 = arith.constant 0 : i32
    %c0_i32_0 = arith.constant 0 : i32
    return %c0_i32, %arg0 : i32, i32
  }
}

</mosaic_0001>

<llo_original>
// kernel: tpu_custom_call.1
$region0: #{tpu_custom_call.1}
  #allocation0 [shape = 'u32[]', space=smem, size = 0x4, offset = 0x4, fixed_abs, tag = 'smem constant byte address 0x4 - core index']
  #allocation1 [shape = 'u32[144,128]{1,0:T(1,128)}', space=vmem, size = 0x12000, scoped, tag = 'internal scratch']
  %s0 = inlined_call_operand.hbm [shape: f32[16,128], index: 0, kind: input, shape index: {}]
  %s1 = inlined_call_operand.hbm [shape: f32[16,128], index: 1, kind: input, shape index: {}]
  %s2 = inlined_call_operand.hbm [shape: f32[1,16], index: 2, kind: output, shape index: {}]
  %s3 = sld [smem:[#allocation0]]
  $region26: #{tpu_custom_call.1} parent=0
    _
  %s5 = ssub.s32 1, %s3
  %s6 = scalar_select 0, %s5, %s3
  $region1: #{tpu_custom_call.1} parent=0
    #allocation2 [shape = 'u8[8192]{0}', space=vmem, size = 0x2000, scoped, tag = 'input window, operand 0, single buffered']
    #allocation3 [shape = 's32[1]{0}', space=sflag, size = 0x4, scoped, tag = 'scoped memory for tpu_custom_call.1']
    #allocation4 [shape = 's32[1]{0}', space=sflag, size = 0x4, scoped, tag = 'scoped memory for tpu_custom_call.1']
    #allocation5 [shape = 'u8[8192]{0}', space=vmem, size = 0x2000, scoped, tag = 'input window, operand 1, single buffered']
    #allocation6 [shape = 's32[1]{0}', space=sflag, size = 0x4, scoped, tag = 'scoped memory for tpu_custom_call.1']
    #allocation7 [shape = 'u8[512]{0}', space=vmem, size = 0x400, scoped, tag = 'output window, operand 0, single buffered']
    %7 = vsyncpa [#allocation3], 0
    %8 = vsyncpa [#allocation6], 0
    %9 = vsyncpa [#allocation4], 0
    // Predicated region
    $region2: #{tpu_custom_call.1} parent=1 // pred_check
      _
    $region3: #{tpu_custom_call.1} parent=1 // pred_check_branch
      %11 = sbr.rel (0) target = $region5
    $region4: #{tpu_custom_call.1} parent=1 // pred_region
      %s13 = ssub.s32 256, 256
      %14 = vsyncadd [#allocation3], %s13
      %s15 = sshll.u32 [#allocation2], 4
      %s16 = int_to_ptr.vmem [resolvable:$true] %s15
      %21 = dma.hbm_to_vmem [thread:$0]  %s0, 256, %s16, [#allocation3], 128, 128, 8
    $region5: #{tpu_custom_call.1} parent=1 // pred_fallthru
      _
    // Predicated region
    $region6: #{tpu_custom_call.1} parent=1 // pred_check
      _
    $region7: #{tpu_custom_call.1} parent=1 // pred_check_branch
      %23 = sbr.rel (0) target = $region9
    $region8: #{tpu_custom_call.1} parent=1 // pred_region
      %s25 = ssub.s32 256, 256
      %26 = vsyncadd [#allocation6], %s25
      %s27 = sshll.u32 [#allocation5], 4
      %s28 = int_to_ptr.vmem [resolvable:$true] %s27
      %33 = dma.hbm_to_vmem [thread:$0]  %s1, 256, %s28, [#allocation6], 128, 128, 8
    $region9: #{tpu_custom_call.1} parent=1 // pred_fallthru
      _
    // Predicated region
    $region10: #{tpu_custom_call.1} parent=1 // pred_check
      _
    $region11: #{tpu_custom_call.1} parent=1 // pred_check_branch
      %35 = sbr.rel (0) target = $region13
    $region12: #{tpu_custom_call.1} parent=1 // pred_region
      %36 = dma.done [#allocation3], 256
    $region13: #{tpu_custom_call.1} parent=1 // pred_fallthru
      _
    // Predicated region
    $region14: #{tpu_custom_call.1} parent=1 // pred_check
      _
    $region15: #{tpu_custom_call.1} parent=1 // pred_check_branch
      %38 = sbr.rel (0) target = $region17
    $region16: #{tpu_custom_call.1} parent=1 // pred_region
      %39 = dma.done [#allocation6], 256
    $region17: #{tpu_custom_call.1} parent=1 // pred_fallthru
      _
    %v40 = vld [vmem:[#allocation2] sm:$0xff]
    %v41 = vld [vmem:[#allocation2 + $0x8] sm:$0xff]
    %v42 = vld [vmem:[#allocation5] sm:$0xff]
    %v43 = vld [vmem:[#allocation5 + $0x8] sm:$0xff]
    %v44 = vsub.f32 %v42, %v40
    %v45 = vsub.f32 %v43, %v41
    %v46 = vmul.f32 %v40, %v40
    %v47 = vmul.f32 %v41, %v41
    %48 = vadd.xlane.f32.xlu0 %v46
    %v49 = vpop.xlane.xlu0 %48
    %50 = vadd.xlane.f32.xlu0 %v47
    %v51 = vpop.xlane.xlu0 %50
    %v52 = vmul.f32 %v44, %v44
    %v53 = vmul.f32 %v45, %v45
    %54 = vadd.xlane.f32.xlu0 %v52
    %v55 = vpop.xlane.xlu0 %54
    %56 = vadd.xlane.f32.xlu0 %v53
    %v57 = vpop.xlane.xlu0 %56
    %v58 = vmul.f32 %v40, %v44
    %v59 = vmul.f32 %v41, %v45
    %60 = vadd.xlane.f32.xlu0 %v58
    %v61 = vpop.xlane.xlu0 %60
    %62 = vadd.xlane.f32.xlu0 %v59
    %v63 = vpop.xlane.xlu0 %62
    %v64 = vmax.f32 %v49, 1e-24
    %v65 = vmax.f32 %v51, 1e-24
    %v66 = vrsqrt.pop %v64
    %v67 = vrsqrt.pop %v65
    %v68 = vmax.f32 %v55, 1e-24
    %v69 = vmax.f32 %v57, 1e-24
    %v70 = vrsqrt.pop %v68
    %v71 = vrsqrt.pop %v69
    %v72 = vsub.f32 0.0, %v61
    %v73 = vsub.f32 0.0, %v63
    %v74 = vmul.f32 %v72, %v66
    %v75 = vmul.f32 %v73, %v67
    %v76 = vmul.f32 %v74, %v70
    %v77 = vmul.f32 %v75, %v71
    %v78 = vsub.f32 %v49, 9.0
    %v79 = vsub.f32 %v51, 9.0
    %v80 = vrsqrt.pop %v78
    %v81 = vmul.f32 %v78, %v80
    %vm82 = vcmp.eq.f32.partialorder %v78, inf
    %v83 = vsel %vm82, %v78, %v81
    %vm84 = vcmp.eq.f32.partialorder %v78, 0.0
    %v85 = vand.u32 %v78, 2147483648
    %v86 = vsel %vm84, %v85, %v83
    %v87 = vrsqrt.pop %v79
    %v88 = vmul.f32 %v79, %v87
    %vm89 = vcmp.eq.f32.partialorder %v79, inf
    %v90 = vsel %vm89, %v79, %v88
    %vm91 = vcmp.eq.f32.partialorder %v79, 0.0
    %v92 = vand.u32 %v79, 2147483648
    %v93 = vsel %vm91, %v92, %v90
    %v94 = vsub.f32 0.0, %v86
    %v95 = vsub.f32 0.0, %v93
    %v96 = vmul.f32 %v94, %v66
    %v97 = vmul.f32 %v95, %v67
    %v98 = vsub.f32 %v76, %v96
    %v99 = vsub.f32 %v77, %v97
    %v100 = vmax.f32 %v98, 0.0
    %v101 = vmax.f32 %v99, 0.0
    %v104 = vlaneseq
    %v105 = vand.u32 %v104, 127
    %v106 = vlaneseq
    %v107 = vshrl.u32 %v106, 7
    %v108 = vsub.s32 %v105, %v107
    %v109 = vrot.slane %v100, %v108
    %v110 = vadd.s32 %v105, 4294967288
    %v111 = vlaneseq
    %v112 = vshrl.u32 %v111, 7
    %v113 = vsub.s32 %v110, %v112
    %v114 = vrot.slane %v101, %v113
    %vm115 = vcmask 130112
    %v116 = vsel %vm115, %v114, %v109
    %vm118 = vcmask 122880
    %119 = vst.msk [vmem:[#allocation7] sm:$0x1] %vm118, %v116
    // Predicated region
    $region18: #{tpu_custom_call.1} parent=1 // pred_check
      _
    $region19: #{tpu_custom_call.1} parent=1 // pred_check_branch
      %121 = sbr.rel (0) target = $region21
    $region20: #{tpu_custom_call.1} parent=1 // pred_region
      %s123 = ssub.s32 16, 16
      %124 = vsyncadd [#allocation4], %s123
      %s126 = sshll.u32 [#allocation7], 4
      %s127 = int_to_ptr.vmem [resolvable:$true] %s126
      %129 = dma.vmem_to_hbm [thread:$0]  %s127, 16, %s2, [#allocation4]
    $region21: #{tpu_custom_call.1} parent=1 // pred_fallthru
      _
    // Predicated region
    $region22: #{tpu_custom_call.1} parent=1 // pred_check
      _
    $region23: #{tpu_custom_call.1} parent=1 // pred_check_branch
      %131 = sbr.rel (0) target = $region25
    $region24: #{tpu_custom_call.1} parent=1 // pred_region
      %132 = dma.done [#allocation4], 16
    $region25: #{tpu_custom_call.1} parent=1 // pred_fallthru
      _
    %133 = vsyncpa [#allocation3], 1
    %134 = vsyncpa [#allocation6], 1
    %135 = vsyncpa [#allocation4], 1

</llo_original>
